<compile_context>
chip_gen: v6e
topology: v6e:2x2x1
jax: 0.10.0
libtpu: 0.0.40
codegen_flags: <defaults>
</compile_context>

<pallas_src>
import functools
from typing import NamedTuple

import jax
import jax.numpy as jnp
from jax import lax
from jax.experimental import pallas as pl
from jax.experimental.pallas import tpu as pltpu

LANE = 128      # vreg lane width (last dim)
SUBLANE = 8     # vreg sublane width (second-to-last dim)


def _round_up(n, m):
    return ((n + m - 1) // m) * m


def _mix32(x):
    """Murmur3-style 32-bit finalizer on int32 (multiplies wrap mod 2^32)."""
    x = (x ^ lax.shift_right_logical(x, 16)) * jnp.int32(-2048144789)  # 0x85EBCA6B
    x = (x ^ lax.shift_right_logical(x, 13)) * jnp.int32(-1028477387)  # 0xC2B2AE35
    x = x ^ lax.shift_right_logical(x, 16)
    return x


# Per-layer odd multipliers for the element counter (decorrelates the two
# dropout layers without a second hash round).
_LAYER_IDX_MULT = {1: -1640531535,   # 0x9E3779B1 (signed)
                   2: 1779033703}    # 0x6A09E667


def _mlp_softmax_kernel(seed_ref, x_ref, w1_ref, b1_ref, w2_ref, b2_ref,
                        w3_ref, b3_ref, out_ref, *,
                        apply_dropout, keep_threshold, inv_keep):
    """Fused MLP + softmax. bf16 MXU matmuls, f32 accumulate / elementwise.

    Grid = (batch_tiles, mc_samples); weights use constant index maps so they
    stay resident in VMEM for the whole grid.
    """

    def dropout(h, layer):
        if not apply_dropout:
            return h  # eval mode: nn.Dropout is the identity.
        rows = lax.broadcasted_iota(jnp.int32, h.shape, 0)
        cols = lax.broadcasted_iota(jnp.int32, h.shape, 1)
        idx = rows * jnp.int32(h.shape[1]) + cols
        # Strided salt over (seed, sample, tile, layer) -> no collisions
        # between adjacent seeds / samples / tiles (review concern).
        salt = (seed_ref[0] * jnp.int32(1000003)
                + pl.program_id(1) * jnp.int32(19349663)     # MC sample
                + pl.program_id(0) * jnp.int32(83492791)     # batch tile
                + jnp.int32(layer * 7919 + 31337))
        bits = _mix32(idx * jnp.int32(_LAYER_IDX_MULT[layer]) + salt)
        keep = bits >= jnp.int32(keep_threshold)              # P(keep) = 1 - p
        return jnp.where(keep, h * jnp.float32(inv_keep), 0.0)  # inverted dropout

    x = x_ref[...]                                             # (tb, Dip) bf16

    # Layer 1: Linear + ReLU (+ optional Dropout)
    h1 = jnp.dot(x, w1_ref[...], preferred_element_type=jnp.float32)
    h1 = jnp.maximum(h1 + b1_ref[...], 0.0)
    h1 = dropout(h1, 1)

    # Layer 2: Linear + ReLU (+ optional Dropout)
    h2 = jnp.dot(h1.astype(jnp.bfloat16), w2_ref[...],
                 preferred_element_type=jnp.float32)
    h2 = jnp.maximum(h2 + b2_ref[...], 0.0)
    h2 = dropout(h2, 2)

    # Output layer: Linear (padded columns carry a -1e30 bias -> exact 0 prob)
    logits = jnp.dot(h2.astype(jnp.bfloat16), w3_ref[...],
                     preferred_element_type=jnp.float32)
    logits = logits + b3_ref[...]

    # Numerically stable softmax; normalization via EUP approx reciprocal.
    m = jnp.max(logits, axis=-1, keepdims=True)
    e = jnp.exp(logits - m)
    denom = jnp.sum(e, axis=-1, keepdims=True)
    out_ref[0] = (e * pl.reciprocal(denom, approx=True)).astype(out_ref.dtype)


class PreparedParams(NamedTuple):
    w1: jax.Array
    b1: jax.Array
    w2: jax.Array
    b2: jax.Array
    w3: jax.Array
    b3: jax.Array
    dims: tuple  # original (input_dim, hidden_dim, num_bins)


def prepare_params(params):
    """One-time lane-dense padding + bf16 cast of the weights (hoisted out of
    the forward so repeated MC passes pay it exactly once)."""
    w1, b1, w2, b2, w3, b3 = params
    Di, Dh = w1.shape
    Do = w3.shape[1]
    Dip, Dhp, Dop = (_round_up(d, LANE) for d in (Di, Dh, Do))
    f32, bf16 = jnp.float32, jnp.bfloat16

    w1p = jnp.zeros((Dip, Dhp), bf16).at[:Di, :Dh].set(w1.astype(bf16))
    b1p = jnp.zeros((1, Dhp), f32).at[:, :Dh].set(b1.astype(f32).reshape(1, Dh))
    w2p = jnp.zeros((Dhp, Dhp), bf16).at[:Dh, :Dh].set(w2.astype(bf16))
    b2p = jnp.zeros((1, Dhp), f32).at[:, :Dh].set(b2.astype(f32).reshape(1, Dh))
    w3p = jnp.zeros((Dhp, Dop), bf16).at[:Dh, :Do].set(w3.astype(bf16))
    # Padded output columns get a huge negative bias so softmax assigns them
    # exactly zero probability (no re-normalization needed after slicing).
    b3p = jnp.full((1, Dop), -1e30, f32).at[:, :Do].set(b3.astype(f32).reshape(1, Do))
    return PreparedParams(w1p, b1p, w2p, b2p, w3p, b3p, dims=(Di, Dh, Do))


def mc_dropout_forward(x, prepared: PreparedParams, *, num_samples=1,
                       dropout_rate=0.1, training=False, seed=0,
                       batch_tile=256):
    """Forward pass of MCDropoutModel as one fused Pallas TPU kernel.

    training=False -> PyTorch model.eval() semantics (Dropout = identity).
    training=True  -> `num_samples` MC-dropout samples drawn in-kernel, all
                      produced by a single pallas_call (sample grid axis).
    Returns (B, num_bins) if num_samples == 1, else (num_samples, B, num_bins).
    """
    Di, Dh, Do = prepared.dims
    B = x.shape[0]
    assert x.shape[1] == Di
    Dip, Dhp = prepared.w1.shape
    Dop = prepared.w3.shape[1]
    S = int(num_samples)

    # Large batch tile amortizes per-step pipeline overhead; capped for tiny B.
    tb = min(batch_tile, _round_up(B, SUBLANE))
    Bp = _round_up(B, tb)

    # Per-call activation pad (weights were padded once in prepare_params).
    xp = jnp.zeros((Bp, Dip), jnp.bfloat16).at[:B, :Di].set(x.astype(jnp.bfloat16))
    seed_arr = jnp.asarray([seed], dtype=jnp.int32)

    apply_dropout = bool(training) and float(dropout_rate) > 0.0
    keep_threshold = int(round(float(dropout_rate) * 2.0 ** 32)) - 2 ** 31
    keep_threshold = max(-(2 ** 31), min(2 ** 31 - 1, keep_threshold))
    kernel = functools.partial(
        _mlp_softmax_kernel,
        apply_dropout=apply_dropout,
        keep_threshold=keep_threshold,
        inv_keep=float(1.0 / (1.0 - dropout_rate)) if dropout_rate < 1.0 else 0.0,
    )

    n_tiles = Bp // tb
    # Sample axis innermost: x tile fetched once per batch tile; weights
    # (constant index maps) resident in VMEM across the entire grid.
    grid = (n_tiles, S)
    const = lambda shape: pl.BlockSpec(shape, lambda i, s, seed: (0, 0))

    out = pl.pallas_call(
        kernel,
        out_shape=jax.ShapeDtypeStruct((S, Bp, Dop), jnp.float32),
        grid_spec=pltpu.PrefetchScalarGridSpec(
            num_scalar_prefetch=1,                      # seed -> SMEM
            grid=grid,
            in_specs=[
                pl.BlockSpec((tb, Dip), lambda i, s, seed: (i, 0)),  # x
                const((Dip, Dhp)),                                   # w1
                const((1, Dhp)),                                     # b1
                const((Dhp, Dhp)),                                   # w2
                const((1, Dhp)),                                     # b2
                const((Dhp, Dop)),                                   # w3
                const((1, Dop)),                                     # b3
            ],
            out_specs=pl.BlockSpec((1, tb, Dop), lambda i, s, seed: (s, i, 0)),
        ),
        compiler_params=pltpu.CompilerParams(
            dimension_semantics=("parallel", "parallel")),
    )(seed_arr, xp, prepared.w1, prepared.b1, prepared.w2, prepared.b2,
      prepared.w3, prepared.b3)

    out = out[:, :B, :Do]
    return out[0] if S == 1 else out


def init_params(key, input_dim, hidden_dim, num_bins):
    """Deterministic init matching nn.Linear's U(-1/sqrt(fan_in), 1/sqrt(fan_in))."""
    def linear(key, fan_in, fan_out):
        kw, kb = jax.random.split(key)
        bound = 1.0 / jnp.sqrt(fan_in)
        w = jax.random.uniform(kw, (fan_in, fan_out), jnp.float32, -bound, bound)
        b = jax.random.uniform(kb, (1, fan_out), jnp.float32, -bound, bound)
        return w, b

    k1, k2, k3 = jax.random.split(key, 3)
    w1, b1 = linear(k1, input_dim, hidden_dim)
    w2, b2 = linear(k2, hidden_dim, hidden_dim)
    w3, b3 = linear(k3, hidden_dim, num_bins)
    return (w1, b1, w2, b2, w3, b3)


if __name__ == "__main__":
    # Small shapes consistent with the module (MLP on flat feature vectors).
    batch, input_dim, hidden_dim, num_bins = 8, 32, 64, 16

    key = jax.random.PRNGKey(0)
    kx, kp = jax.random.split(key)
    x = jax.random.normal(kx, (batch, input_dim), dtype=jnp.float32)
    params = init_params(kp, input_dim, hidden_dim, num_bins)

    prepared = prepare_params(params)   # one-time weight pad / bf16 cast

    # --- eval mode (PyTorch model.eval(): Dropout = identity) ---------------
    out = mc_dropout_forward(x, prepared, training=False)
    out = jax.block_until_ready(out)
    assert out.shape == (batch, num_bins)

    # Reference mirroring the kernel's bf16-operand / f32-accumulate path.
    w1, b1, w2, b2, w3, b3 = params
    bf = jnp.bfloat16
    mm = lambda a, w: jnp.dot(a.astype(bf), w.astype(bf),
                              preferred_element_type=jnp.float32)
    h1 = jnp.maximum(mm(x, w1) + b1, 0.0)
    h2 = jnp.maximum(mm(h1, w2) + b2, 0.0)
    ref = jax.nn.softmax(mm(h2, w3) + b3, axis=-1)
    # approx reciprocal -> ~0.4% relative error on the normalization.
    assert jnp.allclose(out, ref, atol=1e-2), "mismatch vs bf16/f32 reference"
    assert jnp.allclose(jnp.sum(out, axis=-1), 1.0, atol=1e-2)

    # Loose check against the full-f32 reference (bf16 operand rounding only).
    h1f = jnp.maximum(x @ w1 + b1, 0.0)
    h2f = jnp.maximum(h1f @ w2 + b2, 0.0)
    ref_f32 = jax.nn.softmax(h2f @ w3 + b3, axis=-1)
    assert jnp.allclose(out, ref_f32, atol=5e-2), "too far from f32 reference"

    # --- MC dropout: several samples from ONE pallas_call -------------------
    S = 4
    mc = mc_dropout_forward(x, prepared, training=True, num_samples=S,
                            dropout_rate=0.1, seed=123)
    mc = jax.block_until_ready(mc)
    assert mc.shape == (S, batch, num_bins)
    assert bool(jnp.all(jnp.isfinite(mc)))
    assert jnp.allclose(jnp.sum(mc, axis=-1), 1.0, atol=1e-2)
    assert float(jnp.max(jnp.abs(mc[0] - mc[1]))) > 0.0, "MC samples should differ"

    print("KERNEL_OK")
</pallas_src>

<mosaic_0001>
module attributes {stable_mosaic.version = 11 : i64} {
  func.func @_mlp_softmax_kernel(%arg0: i32, %arg1: i32, %arg2: memref<1xi32, #tpu.memory_space<smem>>, %arg3: memref<8x128xbf16, #tpu.memory_space<vmem>>, %arg4: memref<128x128xbf16, #tpu.memory_space<vmem>>, %arg5: memref<1x128xf32, #tpu.memory_space<vmem>>, %arg6: memref<128x128xbf16, #tpu.memory_space<vmem>>, %arg7: memref<1x128xf32, #tpu.memory_space<vmem>>, %arg8: memref<128x128xbf16, #tpu.memory_space<vmem>>, %arg9: memref<1x128xf32, #tpu.memory_space<vmem>>, %arg10: memref<1x8x128xf32, #tpu.memory_space<vmem>>) attributes {dimension_semantics = [#tpu.dimension_semantics<parallel>, #tpu.dimension_semantics<parallel>], iteration_bounds = array<i64: 1, 1>, scalar_prefetch = 1 : i64, scratch_operands = 0 : i64, tpu.core_type = #tpu.core_type<tc>, window_params = [{transform_indices = @transform_0, window_bounds = array<i64: 8, 128>}, {pipeline_mode = #tpu.pipeline_mode<synchronous>, transform_indices = @transform_1, window_bounds = array<i64: 128, 128>}, {pipeline_mode = #tpu.pipeline_mode<synchronous>, transform_indices = @transform_2, window_bounds = array<i64: 1, 128>}, {pipeline_mode = #tpu.pipeline_mode<synchronous>, transform_indices = @transform_3, window_bounds = array<i64: 128, 128>}, {pipeline_mode = #tpu.pipeline_mode<synchronous>, transform_indices = @transform_4, window_bounds = array<i64: 1, 128>}, {pipeline_mode = #tpu.pipeline_mode<synchronous>, transform_indices = @transform_5, window_bounds = array<i64: 128, 128>}, {pipeline_mode = #tpu.pipeline_mode<synchronous>, transform_indices = @transform_6, window_bounds = array<i64: 1, 128>}, {transform_indices = @transform_7, window_bounds = array<i64: 1, 8, 128>}]} {
    %c0 = arith.constant 0 : index
    %c0_0 = arith.constant 0 : index
    %0 = vector.load %arg3[%c0, %c0_0] : memref<8x128xbf16, #tpu.memory_space<vmem>>, vector<8x128xbf16>
    %c0_1 = arith.constant 0 : index
    %c0_2 = arith.constant 0 : index
    %1 = vector.load %arg4[%c0_1, %c0_2] : memref<128x128xbf16, #tpu.memory_space<vmem>>, vector<128x128xbf16>
    %cst = arith.constant dense<0.000000e+00> : vector<8x128xf32>
    %2 = tpu.matmul %0, %1, %cst {dimension_numbers = #tpu.dot_dimension_numbers<[1], [0], [0], [1], [0, 0, 1, 1], [], []>} : vector<8x128xbf16>, vector<128x128xbf16>, vector<8x128xf32> -> vector<8x128xf32>
    %c0_3 = arith.constant 0 : index
    %c0_4 = arith.constant 0 : index
    %3 = vector.load %arg5[%c0_3, %c0_4] : memref<1x128xf32, #tpu.memory_space<vmem>>, vector<1x128xf32>
    %4 = vector.broadcast %3 : vector<1x128xf32> to vector<8x128xf32>
    %5 = arith.addf %2, %4 : vector<8x128xf32>
    %cst_5 = arith.constant 0.000000e+00 : f32
    %6 = vector.broadcast %cst_5 : f32 to vector<8x128xf32>
    %7 = arith.maximumf %5, %6 : vector<8x128xf32>
    %8 = arith.truncf %7 : vector<8x128xf32> to vector<8x128xbf16>
    %c0_6 = arith.constant 0 : index
    %c0_7 = arith.constant 0 : index
    %9 = vector.load %arg6[%c0_6, %c0_7] : memref<128x128xbf16, #tpu.memory_space<vmem>>, vector<128x128xbf16>
    %cst_8 = arith.constant dense<0.000000e+00> : vector<8x128xf32>
    %10 = tpu.matmul %8, %9, %cst_8 {dimension_numbers = #tpu.dot_dimension_numbers<[1], [0], [0], [1], [0, 0, 1, 1], [], []>} : vector<8x128xbf16>, vector<128x128xbf16>, vector<8x128xf32> -> vector<8x128xf32>
    %c0_9 = arith.constant 0 : index
    %c0_10 = arith.constant 0 : index
    %11 = vector.load %arg7[%c0_9, %c0_10] : memref<1x128xf32, #tpu.memory_space<vmem>>, vector<1x128xf32>
    %12 = vector.broadcast %11 : vector<1x128xf32> to vector<8x128xf32>
    %13 = arith.addf %10, %12 : vector<8x128xf32>
    %cst_11 = arith.constant 0.000000e+00 : f32
    %14 = vector.broadcast %cst_11 : f32 to vector<8x128xf32>
    %15 = arith.maximumf %13, %14 : vector<8x128xf32>
    %16 = arith.truncf %15 : vector<8x128xf32> to vector<8x128xbf16>
    %c0_12 = arith.constant 0 : index
    %c0_13 = arith.constant 0 : index
    %17 = vector.load %arg8[%c0_12, %c0_13] : memref<128x128xbf16, #tpu.memory_space<vmem>>, vector<128x128xbf16>
    %cst_14 = arith.constant dense<0.000000e+00> : vector<8x128xf32>
    %18 = tpu.matmul %16, %17, %cst_14 {dimension_numbers = #tpu.dot_dimension_numbers<[1], [0], [0], [1], [0, 0, 1, 1], [], []>} : vector<8x128xbf16>, vector<128x128xbf16>, vector<8x128xf32> -> vector<8x128xf32>
    %c0_15 = arith.constant 0 : index
    %c0_16 = arith.constant 0 : index
    %19 = vector.load %arg9[%c0_15, %c0_16] : memref<1x128xf32, #tpu.memory_space<vmem>>, vector<1x128xf32>
    %20 = vector.broadcast %19 : vector<1x128xf32> to vector<8x128xf32>
    %21 = arith.addf %18, %20 : vector<8x128xf32>
    %cst_17 = arith.constant dense<0xFF800000> : vector<8xf32>
    %22 = vector.multi_reduction <maximumf>, %21, %cst_17 [1] : vector<8x128xf32> to vector<8xf32>
    %23 = vector.shape_cast %22 : vector<8xf32> to vector<8x1xf32>
    %24 = vector.broadcast %23 : vector<8x1xf32> to vector<8x128xf32>
    %25 = arith.subf %21, %24 : vector<8x128xf32>
    %26 = math.exp %25 : vector<8x128xf32>
    %cst_18 = arith.constant dense<0.000000e+00> : vector<8xf32>
    %27 = vector.multi_reduction <add>, %26, %cst_18 [1] : vector<8x128xf32> to vector<8xf32>
    %28 = vector.shape_cast %27 : vector<8xf32> to vector<8x1xf32>
    %29 = tpu.reciprocal %28 {approx = true} : vector<8x1xf32> -> vector<8x1xf32>
    %30 = vector.broadcast %29 : vector<8x1xf32> to vector<8x128xf32>
    %31 = arith.mulf %26, %30 : vector<8x128xf32>
    %c0_19 = arith.constant 0 : index
    %c0_20 = arith.constant 0 : index
    %c0_21 = arith.constant 0 : index
    %32 = vector.load %arg10[%c0_19, %c0_20, %c0_21] : memref<1x8x128xf32, #tpu.memory_space<vmem>>, vector<1x8x128xf32>
    %33 = vector.shape_cast %32 : vector<1x8x128xf32> to vector<8x128xf32>
    %34 = vector.shape_cast %31 : vector<8x128xf32> to vector<1x8x128xf32>
    tpu.vector_store %arg10[%c0_19, %c0_20, %c0_21], %34 {strides = array<i32>} : memref<1x8x128xf32, #tpu.memory_space<vmem>>, vector<1x8x128xf32>,
    return
  }
  func.func @transform_0(%arg0: i32, %arg1: i32, %arg2: memref<1xi32, #tpu.memory_space<smem>>) -> (i32, i32) {
    %c0_i32 = arith.constant 0 : i32
    %c0_i32_0 = arith.constant 0 : i32
    return %arg0, %c0_i32 : i32, i32
  }
  func.func @transform_1(%arg0: i32, %arg1: i32, %arg2: memref<1xi32, #tpu.memory_space<smem>>) -> (i32, i32) {
    %c0_i32 = arith.constant 0 : i32
    %c0_i32_0 = arith.constant 0 : i32
    %c0_i32_1 = arith.constant 0 : i32
    return %c0_i32, %c0_i32_0 : i32, i32
  }
  func.func @transform_2(%arg0: i32, %arg1: i32, %arg2: memref<1xi32, #tpu.memory_space<smem>>) -> (i32, i32) {
    %c0_i32 = arith.constant 0 : i32
    %c0_i32_0 = arith.constant 0 : i32
    %c0_i32_1 = arith.constant 0 : i32
    return %c0_i32, %c0_i32_0 : i32, i32
  }
  func.func @transform_3(%arg0: i32, %arg1: i32, %arg2: memref<1xi32, #tpu.memory_space<smem>>) -> (i32, i32) {
    %c0_i32 = arith.constant 0 : i32
    %c0_i32_0 = arith.constant 0 : i32
    %c0_i32_1 = arith.constant 0 : i32
    return %c0_i32, %c0_i32_0 : i32, i32
  }
  func.func @transform_4(%arg0: i32, %arg1: i32, %arg2: memref<1xi32, #tpu.memory_space<smem>>) -> (i32, i32) {
    %c0_i32 = arith.constant 0 : i32
    %c0_i32_0 = arith.constant 0 : i32
    %c0_i32_1 = arith.constant 0 : i32
    return %c0_i32, %c0_i32_0 : i32, i32
  }
  func.func @transform_5(%arg0: i32, %arg1: i32, %arg2: memref<1xi32, #tpu.memory_space<smem>>) -> (i32, i32) {
    %c0_i32 = arith.constant 0 : i32
    %c0_i32_0 = arith.constant 0 : i32
    %c0_i32_1 = arith.constant 0 : i32
    return %c0_i32, %c0_i32_0 : i32, i32
  }
  func.func @transform_6(%arg0: i32, %arg1: i32, %arg2: memref<1xi32, #tpu.memory_space<smem>>) -> (i32, i32) {
    %c0_i32 = arith.constant 0 : i32
    %c0_i32_0 = arith.constant 0 : i32
    %c0_i32_1 = arith.constant 0 : i32
    return %c0_i32, %c0_i32_0 : i32, i32
  }
  func.func @transform_7(%arg0: i32, %arg1: i32, %arg2: memref<1xi32, #tpu.memory_space<smem>>) -> (i32, i32, i32) {
    %c0_i32 = arith.constant 0 : i32
    %c0_i32_0 = arith.constant 0 : i32
    return %arg1, %arg0, %c0_i32 : i32, i32, i32
  }
}

</mosaic_0001>

<llo_original>
// kernel: tpu_custom_call.1
$region0: #{tpu_custom_call.1}
  #allocation0 [shape = 'u32[]', space=smem, size = 0x4, offset = 0x4, fixed_abs, tag = 'smem constant byte address 0x4 - core index']
  #allocation1 [shape = 'u32[144,128]{1,0:T(1,128)}', space=vmem, size = 0x12000, scoped, tag = 'internal scratch']
  #allocation2 [shape = 's32[1]{0}', space=sflag, size = 0x4, scoped, tag = 'scoped memory for tpu_custom_call.1']
  #allocation3 [shape = 's32[1]{0:T(128)S(6)}', space=smem, size = 0x200, scoped, tag = 'prefetched SMEM operand 0']
  %s0 = inlined_call_operand.<no memory space> [shape: s32[1], index: 0, kind: input, shape index: {}]
  %s1 = inlined_call_operand.hbm [shape: bf16[8,128], index: 1, kind: input, shape index: {}]
  %s2 = inlined_call_operand.hbm [shape: bf16[128,128], index: 2, kind: input, shape index: {}]
  %s3 = inlined_call_operand.vmem [shape: f32[1,128], index: 3, kind: input, shape index: {}]
  %s4 = inlined_call_operand.hbm [shape: bf16[128,128], index: 4, kind: input, shape index: {}]
  %s5 = inlined_call_operand.vmem [shape: f32[1,128], index: 5, kind: input, shape index: {}]
  %s6 = inlined_call_operand.hbm [shape: bf16[128,128], index: 6, kind: input, shape index: {}]
  %s7 = inlined_call_operand.vmem [shape: f32[1,128], index: 7, kind: input, shape index: {}]
  %s8 = inlined_call_operand.hbm [shape: f32[1,8,128], index: 8, kind: output, shape index: {}]
  %s9 = sld [smem:[#allocation0]]
  $region54: #{tpu_custom_call.1} parent=0
    _
  %s11 = ssub.s32 1, %s9
  %s12 = scalar_select 0, %s11, %s9
  %13 = sst [smem:[#allocation3]] %s0
  $region1: #{tpu_custom_call.1} parent=0
    #allocation4 [shape = 'u8[2048]{0}', space=vmem, size = 0x800, scoped, tag = 'input window, operand 1, single buffered']
    #allocation5 [shape = 's32[1]{0}', space=sflag, size = 0x4, scoped, tag = 'scoped memory for tpu_custom_call.1']
    #allocation6 [shape = 's32[1]{0}', space=sflag, size = 0x4, scoped, tag = 'scoped memory for tpu_custom_call.1']
    #allocation7 [shape = 'u8[32768]{0}', space=vmem, size = 0x8000, scoped, tag = 'input window, operand 2, single buffered']
    #allocation8 [shape = 's32[1]{0}', space=sflag, size = 0x4, scoped, tag = 'scoped memory for tpu_custom_call.1']
    #allocation9 [shape = 'u8[32768]{0}', space=vmem, size = 0x8000, scoped, tag = 'input window, operand 4, single buffered']
    #allocation10 [shape = 'u8[32768]{0}', space=vmem, size = 0x8000, scoped, tag = 'input window, operand 6, single buffered']
    #allocation11 [shape = 's32[1]{0}', space=sflag, size = 0x4, scoped, tag = 'scoped memory for tpu_custom_call.1']
    #allocation12 [shape = 'u8[4096]{0}', space=vmem, size = 0x1000, scoped, tag = 'output window, operand 0, single buffered']
    %14 = vsyncpa [#allocation5], 0
    %15 = vsyncpa [#allocation8], 0
    %16 = vsyncpa [#allocation11], 0
    %17 = vsyncpa [#allocation6], 0
    // Predicated region
    $region2: #{tpu_custom_call.1} parent=1 // pred_check
      _
    $region3: #{tpu_custom_call.1} parent=1 // pred_check_branch
      %19 = sbr.rel (0) target = $region5
    $region4: #{tpu_custom_call.1} parent=1 // pred_region
      %s21 = ssub.s32 64, 64
      %22 = vsyncadd [#allocation5], %s21
      %s24 = sshll.u32 [#allocation4], 4
      %s25 = int_to_ptr.vmem [resolvable:$true] %s24
      %27 = dma.hbm_to_vmem [thread:$0]  %s1, 64, %s25, [#allocation5]
    $region5: #{tpu_custom_call.1} parent=1 // pred_fallthru
      _
    // Predicated region
    $region6: #{tpu_custom_call.1} parent=1 // pred_check
      _
    $region7: #{tpu_custom_call.1} parent=1 // pred_check_branch
      %29 = sbr.rel (0) target = $region9
    $region8: #{tpu_custom_call.1} parent=1 // pred_region
      %s31 = ssub.s32 1024, 1024
      %32 = vsyncadd [#allocation8], %s31
      %s33 = sshll.u32 [#allocation7], 4
      %s34 = int_to_ptr.vmem [resolvable:$true] %s33
      %39 = dma.hbm_to_vmem [thread:$0]  %s2, 1024, %s34, [#allocation8], 64, 64, 4
    $region9: #{tpu_custom_call.1} parent=1 // pred_fallthru
      _
    // Predicated region
    $region10: #{tpu_custom_call.1} parent=1 // pred_check
      _
    $region11: #{tpu_custom_call.1} parent=1 // pred_check_branch
      %41 = sbr.rel (0) target = $region13
    $region12: #{tpu_custom_call.1} parent=1 // pred_region
      _
    $region13: #{tpu_custom_call.1} parent=1 // pred_fallthru
      _
    // Predicated region
    $region14: #{tpu_custom_call.1} parent=1 // pred_check
      _
    $region15: #{tpu_custom_call.1} parent=1 // pred_check_branch
      %43 = sbr.rel (0) target = $region17
    $region16: #{tpu_custom_call.1} parent=1 // pred_region
      %s45 = ssub.s32 1024, 1024
      %46 = vsyncadd [#allocation8], %s45
      %s47 = sshll.u32 [#allocation9], 4
      %s48 = int_to_ptr.vmem [resolvable:$true] %s47
      %53 = dma.hbm_to_vmem [thread:$0]  %s4, 1024, %s48, [#allocation8], 64, 64, 4
    $region17: #{tpu_custom_call.1} parent=1 // pred_fallthru
      _
    // Predicated region
    $region18: #{tpu_custom_call.1} parent=1 // pred_check
      _
    $region19: #{tpu_custom_call.1} parent=1 // pred_check_branch
      %55 = sbr.rel (0) target = $region21
    $region20: #{tpu_custom_call.1} parent=1 // pred_region
      _
    $region21: #{tpu_custom_call.1} parent=1 // pred_fallthru
      _
    // Predicated region
    $region22: #{tpu_custom_call.1} parent=1 // pred_check
      _
    $region23: #{tpu_custom_call.1} parent=1 // pred_check_branch
      %57 = sbr.rel (0) target = $region25
    $region24: #{tpu_custom_call.1} parent=1 // pred_region
      %s59 = ssub.s32 1024, 1024
      %60 = vsyncadd [#allocation11], %s59
      %s61 = sshll.u32 [#allocation10], 4
      %s62 = int_to_ptr.vmem [resolvable:$true] %s61
      %67 = dma.hbm_to_vmem [thread:$0]  %s6, 1024, %s62, [#allocation11], 64, 64, 4
    $region25: #{tpu_custom_call.1} parent=1 // pred_fallthru
      _
    // Predicated region
    $region26: #{tpu_custom_call.1} parent=1 // pred_check
      _
    $region27: #{tpu_custom_call.1} parent=1 // pred_check_branch
      %69 = sbr.rel (0) target = $region29
    $region28: #{tpu_custom_call.1} parent=1 // pred_region
      _
    $region29: #{tpu_custom_call.1} parent=1 // pred_fallthru
      _
    // Predicated region
    $region30: #{tpu_custom_call.1} parent=1 // pred_check
      _
    $region31: #{tpu_custom_call.1} parent=1 // pred_check_branch
      %71 = sbr.rel (0) target = $region33
    $region32: #{tpu_custom_call.1} parent=1 // pred_region
      %72 = dma.done [#allocation5], 64
    $region33: #{tpu_custom_call.1} parent=1 // pred_fallthru
      _
    // Predicated region
    $region34: #{tpu_custom_call.1} parent=1 // pred_check
      _
    $region35: #{tpu_custom_call.1} parent=1 // pred_check_branch
      %74 = sbr.rel (0) target = $region37
    $region36: #{tpu_custom_call.1} parent=1 // pred_region
      %75 = dma.done [#allocation8], 1024
    $region37: #{tpu_custom_call.1} parent=1 // pred_fallthru
      _
    // Predicated region
    $region38: #{tpu_custom_call.1} parent=1 // pred_check
      _
    $region39: #{tpu_custom_call.1} parent=1 // pred_check_branch
      %77 = sbr.rel (0) target = $region41
    $region40: #{tpu_custom_call.1} parent=1 // pred_region
      %78 = dma.done [#allocation8], 1024
    $region41: #{tpu_custom_call.1} parent=1 // pred_fallthru
      _
    // Predicated region
    $region42: #{tpu_custom_call.1} parent=1 // pred_check
      _
    $region43: #{tpu_custom_call.1} parent=1 // pred_check_branch
      %80 = sbr.rel (0) target = $region45
    $region44: #{tpu_custom_call.1} parent=1 // pred_region
      %81 = dma.done [#allocation11], 1024
    $region45: #{tpu_custom_call.1} parent=1 // pred_fallthru
      _
    %v83 = vld [vmem:[#allocation4] sm:$0xf]
    %v84 = vld [vmem:[#allocation7] sm:$0xf]
    %v85 = vld [vmem:[#allocation7 + $0x4] sm:$0xf]
    %v86 = vld [vmem:[#allocation7 + $0x8] sm:$0xf]
    %v87 = vld [vmem:[#allocation7 + $0xc] sm:$0xf]
    %v88 = vld [vmem:[#allocation7 + $0x10] sm:$0xf]
    %v89 = vld [vmem:[#allocation7 + $0x14] sm:$0xf]
    %v90 = vld [vmem:[#allocation7 + $0x18] sm:$0xf]
    %v91 = vld [vmem:[#allocation7 + $0x1c] sm:$0xf]
    %v92 = vld [vmem:[#allocation7 + $0x20] sm:$0xf]
    %v93 = vld [vmem:[#allocation7 + $0x24] sm:$0xf]
    %v94 = vld [vmem:[#allocation7 + $0x28] sm:$0xf]
    %v95 = vld [vmem:[#allocation7 + $0x2c] sm:$0xf]
    %v96 = vld [vmem:[#allocation7 + $0x30] sm:$0xf]
    %v97 = vld [vmem:[#allocation7 + $0x34] sm:$0xf]
    %v98 = vld [vmem:[#allocation7 + $0x38] sm:$0xf]
    %v99 = vld [vmem:[#allocation7 + $0x3c] sm:$0xf]
    %v100 = vld [vmem:[%s3] sm:$0x1]
    %v102 = vlaneseq
    %v103 = vshrl.u32 %v102, 7
    %v104 = vsub.s32 0, %v103
    %v105 = vrot.slane %v100, %v104
    %v123 = vunpack.c.l.b16 %v84
    %v124 = vunpack.c.l.b16 %v85
    %v125 = vunpack.c.l.b16 %v86
    %v126 = vunpack.c.l.b16 %v87
    %v127 = vunpack.c.l.b16 %v88
    %v128 = vunpack.c.l.b16 %v89
    %v129 = vunpack.c.l.b16 %v90
    %v130 = vunpack.c.l.b16 %v91
    %v131 = vunpack.c.l.b16 %v92
    %v132 = vunpack.c.l.b16 %v93
    %v133 = vunpack.c.l.b16 %v94
    %v134 = vunpack.c.l.b16 %v95
    %v135 = vunpack.c.l.b16 %v96
    %v136 = vunpack.c.l.b16 %v97
    %v137 = vunpack.c.l.b16 %v98
    %v138 = vunpack.c.l.b16 %v99
    %v139 = vpack.c.b16 %v124, %v123
    %v140 = vpack.c.b16 %v126, %v125
    %v141 = vpack.c.b16 %v128, %v127
    %v142 = vpack.c.b16 %v130, %v129
    %v143 = vpack.c.b16 %v132, %v131
    %v144 = vpack.c.b16 %v134, %v133
    %v145 = vpack.c.b16 %v136, %v135
    %v146 = vpack.c.b16 %v138, %v137
    %155 = vmatprep.subr.bf16.mxu0 0
    %156 = vmatpush1.bf16.msra.mxu0 %v146
    %157 = vmatprep.subr.bf16.mxu0 0
    %158 = vmatpush1.bf16.msra.mxu0 %v145
    %159 = vmatprep.subr.bf16.mxu0 0
    %160 = vmatpush1.bf16.msra.mxu0 %v144
    %161 = vmatprep.subr.bf16.mxu0 0
    %162 = vmatpush1.bf16.msra.mxu0 %v143
    %163 = vmatprep.subr.bf16.mxu0 0
    %164 = vmatpush1.bf16.msra.mxu0 %v142
    %165 = vmatprep.subr.bf16.mxu0 0
    %166 = vmatpush1.bf16.msra.mxu0 %v141
    %167 = vmatprep.subr.bf16.mxu0 0
    %168 = vmatpush1.bf16.msra.mxu0 %v140
    %169 = vmatprep.subr.bf16.mxu0 0
    %170 = vmatpush1.bf16.msra.mxu0 %v139
    %171 = vmatprep.subr.bf16.mxu0 0
    %172 = vmatpush2.bf16.msra.mxu0 0
    %173 = vmatprep.subr.bf16.mxu0 0
    %174 = vmatpush2.bf16.msra.mxu0 0
    %175 = vmatprep.subr.bf16.mxu0 0
    %176 = vmatpush2.bf16.msra.mxu0 0
    %177 = vmatprep.subr.bf16.mxu0 0
    %178 = vmatpush2.bf16.msra.mxu0 0
    %179 = vmatprep.subr.bf16.mxu0 0
    %180 = vmatpush2.bf16.msra.mxu0 0
    %181 = vmatprep.subr.bf16.mxu0 0
    %182 = vmatpush2.bf16.msra.mxu0 0
    %183 = vmatprep.subr.bf16.mxu0 0
    %184 = vmatpush2.bf16.msra.mxu0 0
    %185 = vmatprep.subr.bf16.mxu0 0
    %186 = vmatpush2.bf16.msra.mxu0 0
    %187 = vmatprep.mubr.bf16.mxu0 0
    %188 = vmatmul.mubr.bf16.gmra.mxu0 %v83
    %v189 = vpop.f32.mrf.mxu0
    %v190 = vadd.f32 %v105, %v189
    %v191 = vpop.f32.mrf.mxu0
    %v192 = vpop.f32.mrf.mxu0
    %v193 = vpop.f32.mrf.mxu0
    %194 = vdwg.mxu0
    %v195 = vmax.f32 %v190, 0.0
    %v196 = vpack.c.bf16 %v195, %v195
    %v197 = vld [vmem:[#allocation9] sm:$0xf]
    %v198 = vld [vmem:[#allocation9 + $0x4] sm:$0xf]
    %v199 = vld [vmem:[#allocation9 + $0x8] sm:$0xf]
    %v200 = vld [vmem:[#allocation9 + $0xc] sm:$0xf]
    %v201 = vld [vmem:[#allocation9 + $0x10] sm:$0xf]
    %v202 = vld [vmem:[#allocation9 + $0x14] sm:$0xf]
    %v203 = vld [vmem:[#allocation9 + $0x18] sm:$0xf]
    %v204 = vld [vmem:[#allocation9 + $0x1c] sm:$0xf]
    %v205 = vld [vmem:[#allocation9 + $0x20] sm:$0xf]
    %v206 = vld [vmem:[#allocation9 + $0x24] sm:$0xf]
    %v207 = vld [vmem:[#allocation9 + $0x28] sm:$0xf]
    %v208 = vld [vmem:[#allocation9 + $0x2c] sm:$0xf]
    %v209 = vld [vmem:[#allocation9 + $0x30] sm:$0xf]
    %v210 = vld [vmem:[#allocation9 + $0x34] sm:$0xf]
    %v211 = vld [vmem:[#allocation9 + $0x38] sm:$0xf]
    %v212 = vld [vmem:[#allocation9 + $0x3c] sm:$0xf]
    %v213 = vld [vmem:[%s5] sm:$0x1]
    %v215 = vlaneseq
    %v216 = vshrl.u32 %v215, 7
    %v217 = vsub.s32 0, %v216
    %v218 = vrot.slane %v213, %v217
    %v236 = vunpack.c.l.b16 %v197
    %v237 = vunpack.c.l.b16 %v198
    %v238 = vunpack.c.l.b16 %v199
    %v239 = vunpack.c.l.b16 %v200
    %v240 = vunpack.c.l.b16 %v201
    %v241 = vunpack.c.l.b16 %v202
    %v242 = vunpack.c.l.b16 %v203
    %v243 = vunpack.c.l.b16 %v204
    %v244 = vunpack.c.l.b16 %v205
    %v245 = vunpack.c.l.b16 %v206
    %v246 = vunpack.c.l.b16 %v207
    %v247 = vunpack.c.l.b16 %v208
    %v248 = vunpack.c.l.b16 %v209
    %v249 = vunpack.c.l.b16 %v210
    %v250 = vunpack.c.l.b16 %v211
    %v251 = vunpack.c.l.b16 %v212
    %v252 = vpack.c.b16 %v237, %v236
    %v253 = vpack.c.b16 %v239, %v238
    %v254 = vpack.c.b16 %v241, %v240
    %v255 = vpack.c.b16 %v243, %v242
    %v256 = vpack.c.b16 %v245, %v244
    %v257 = vpack.c.b16 %v247, %v246
    %v258 = vpack.c.b16 %v249, %v248
    %v259 = vpack.c.b16 %v251, %v250
    %268 = vmatprep.subr.bf16.mxu0 0
    %269 = vmatpush1.bf16.msra.mxu0 %v259
    %270 = vmatprep.subr.bf16.mxu0 0
    %271 = vmatpush1.bf16.msra.mxu0 %v258
    %272 = vmatprep.subr.bf16.mxu0 0
    %273 = vmatpush1.bf16.msra.mxu0 %v257
    %274 = vmatprep.subr.bf16.mxu0 0
    %275 = vmatpush1.bf16.msra.mxu0 %v256
    %276 = vmatprep.subr.bf16.mxu0 0
    %277 = vmatpush1.bf16.msra.mxu0 %v255
    %278 = vmatprep.subr.bf16.mxu0 0
    %279 = vmatpush1.bf16.msra.mxu0 %v254
    %280 = vmatprep.subr.bf16.mxu0 0
    %281 = vmatpush1.bf16.msra.mxu0 %v253
    %282 = vmatprep.subr.bf16.mxu0 0
    %283 = vmatpush1.bf16.msra.mxu0 %v252
    %284 = vmatprep.subr.bf16.mxu0 0
    %285 = vmatpush2.bf16.msra.mxu0 0
    %286 = vmatprep.subr.bf16.mxu0 0
    %287 = vmatpush2.bf16.msra.mxu0 0
    %288 = vmatprep.subr.bf16.mxu0 0
    %289 = vmatpush2.bf16.msra.mxu0 0
    %290 = vmatprep.subr.bf16.mxu0 0
    %291 = vmatpush2.bf16.msra.mxu0 0
    %292 = vmatprep.subr.bf16.mxu0 0
    %293 = vmatpush2.bf16.msra.mxu0 0
    %294 = vmatprep.subr.bf16.mxu0 0
    %295 = vmatpush2.bf16.msra.mxu0 0
    %296 = vmatprep.subr.bf16.mxu0 0
    %297 = vmatpush2.bf16.msra.mxu0 0
    %298 = vmatprep.subr.bf16.mxu0 0
    %299 = vmatpush2.bf16.msra.mxu0 0
    %300 = vmatprep.mubr.bf16.mxu0 0
    %301 = vmatmul.mubr.bf16.gmra.mxu0 %v196
    %v302 = vpop.f32.mrf.mxu0
    %v303 = vadd.f32 %v218, %v302
    %v304 = vpop.f32.mrf.mxu0
    %v305 = vpop.f32.mrf.mxu0
    %v306 = vpop.f32.mrf.mxu0
    %307 = vdwg.mxu0
    %v308 = vmax.f32 %v303, 0.0
    %v309 = vpack.c.bf16 %v308, %v308
    %v310 = vld [vmem:[#allocation10] sm:$0xf]
    %v311 = vld [vmem:[#allocation10 + $0x4] sm:$0xf]
    %v312 = vld [vmem:[#allocation10 + $0x8] sm:$0xf]
    %v313 = vld [vmem:[#allocation10 + $0xc] sm:$0xf]
    %v314 = vld [vmem:[#allocation10 + $0x10] sm:$0xf]
    %v315 = vld [vmem:[#allocation10 + $0x14] sm:$0xf]
    %v316 = vld [vmem:[#allocation10 + $0x18] sm:$0xf]
    %v317 = vld [vmem:[#allocation10 + $0x1c] sm:$0xf]
    %v318 = vld [vmem:[#allocation10 + $0x20] sm:$0xf]
    %v319 = vld [vmem:[#allocation10 + $0x24] sm:$0xf]
    %v320 = vld [vmem:[#allocation10 + $0x28] sm:$0xf]
    %v321 = vld [vmem:[#allocation10 + $0x2c] sm:$0xf]
    %v322 = vld [vmem:[#allocation10 + $0x30] sm:$0xf]
    %v323 = vld [vmem:[#allocation10 + $0x34] sm:$0xf]
    %v324 = vld [vmem:[#allocation10 + $0x38] sm:$0xf]
    %v325 = vld [vmem:[#allocation10 + $0x3c] sm:$0xf]
    %v326 = vld [vmem:[%s7] sm:$0x1]
    %v328 = vlaneseq
    %v329 = vshrl.u32 %v328, 7
    %v330 = vsub.s32 0, %v329
    %v331 = vrot.slane %v326, %v330
    %v349 = vunpack.c.l.b16 %v310
    %v350 = vunpack.c.l.b16 %v311
    %v351 = vunpack.c.l.b16 %v312
    %v352 = vunpack.c.l.b16 %v313
    %v353 = vunpack.c.l.b16 %v314
    %v354 = vunpack.c.l.b16 %v315
    %v355 = vunpack.c.l.b16 %v316
    %v356 = vunpack.c.l.b16 %v317
    %v357 = vunpack.c.l.b16 %v318
    %v358 = vunpack.c.l.b16 %v319
    %v359 = vunpack.c.l.b16 %v320
    %v360 = vunpack.c.l.b16 %v321
    %v361 = vunpack.c.l.b16 %v322
    %v362 = vunpack.c.l.b16 %v323
    %v363 = vunpack.c.l.b16 %v324
    %v364 = vunpack.c.l.b16 %v325
    %v365 = vpack.c.b16 %v350, %v349
    %v366 = vpack.c.b16 %v352, %v351
    %v367 = vpack.c.b16 %v354, %v353
    %v368 = vpack.c.b16 %v356, %v355
    %v369 = vpack.c.b16 %v358, %v357
    %v370 = vpack.c.b16 %v360, %v359
    %v371 = vpack.c.b16 %v362, %v361
    %v372 = vpack.c.b16 %v364, %v363
    %381 = vmatprep.subr.bf16.mxu0 0
    %382 = vmatpush1.bf16.msra.mxu0 %v372
    %383 = vmatprep.subr.bf16.mxu0 0
    %384 = vmatpush1.bf16.msra.mxu0 %v371
    %385 = vmatprep.subr.bf16.mxu0 0
    %386 = vmatpush1.bf16.msra.mxu0 %v370
    %387 = vmatprep.subr.bf16.mxu0 0
    %388 = vmatpush1.bf16.msra.mxu0 %v369
    %389 = vmatprep.subr.bf16.mxu0 0
    %390 = vmatpush1.bf16.msra.mxu0 %v368
    %391 = vmatprep.subr.bf16.mxu0 0
    %392 = vmatpush1.bf16.msra.mxu0 %v367
    %393 = vmatprep.subr.bf16.mxu0 0
    %394 = vmatpush1.bf16.msra.mxu0 %v366
    %395 = vmatprep.subr.bf16.mxu0 0
    %396 = vmatpush1.bf16.msra.mxu0 %v365
    %397 = vmatprep.subr.bf16.mxu0 0
    %398 = vmatpush2.bf16.msra.mxu0 0
    %399 = vmatprep.subr.bf16.mxu0 0
    %400 = vmatpush2.bf16.msra.mxu0 0
    %401 = vmatprep.subr.bf16.mxu0 0
    %402 = vmatpush2.bf16.msra.mxu0 0
    %403 = vmatprep.subr.bf16.mxu0 0
    %404 = vmatpush2.bf16.msra.mxu0 0
    %405 = vmatprep.subr.bf16.mxu0 0
    %406 = vmatpush2.bf16.msra.mxu0 0
    %407 = vmatprep.subr.bf16.mxu0 0
    %408 = vmatpush2.bf16.msra.mxu0 0
    %409 = vmatprep.subr.bf16.mxu0 0
    %410 = vmatpush2.bf16.msra.mxu0 0
    %411 = vmatprep.subr.bf16.mxu0 0
    %412 = vmatpush2.bf16.msra.mxu0 0
    %413 = vmatprep.mubr.bf16.mxu0 0
    %414 = vmatmul.mubr.bf16.gmra.mxu0 %v309
    %v415 = vpop.f32.mrf.mxu0
    %v416 = vadd.f32 %v331, %v415
    %v417 = vpop.f32.mrf.mxu0
    %v418 = vpop.f32.mrf.mxu0
    %v419 = vpop.f32.mrf.mxu0
    %420 = vdwg.mxu0
    %421 = vmax.xlane.f32.xlu0 %v416
    %v422 = vpop.xlane.xlu0 %421
    %v423 = vsub.f32 %v416, %v422
    %v424 = vmul.f32 %v423, 1.442695
    %v425 = vpow.pop %v424
    %426 = vadd.xlane.f32.xlu0 %v425
    %v427 = vpop.xlane.xlu0 %426
    %v428 = vrcp.pop %v427
    %v429 = vmul.f32 %v425, %v428
    %430 = vst [vmem:[#allocation12] sm:$0xff] %v429
    // Predicated region
    $region46: #{tpu_custom_call.1} parent=1 // pred_check
      _
    $region47: #{tpu_custom_call.1} parent=1 // pred_check_branch
      %432 = sbr.rel (0) target = $region49
    $region48: #{tpu_custom_call.1} parent=1 // pred_region
      %s434 = ssub.s32 128, 128
      %435 = vsyncadd [#allocation6], %s434
      %s437 = sshll.u32 [#allocation12], 4
      %s438 = int_to_ptr.vmem [resolvable:$true] %s437
      %440 = dma.vmem_to_hbm [thread:$0]  %s438, 128, %s8, [#allocation6]
    $region49: #{tpu_custom_call.1} parent=1 // pred_fallthru
      _
    // Predicated region
    $region50: #{tpu_custom_call.1} parent=1 // pred_check
      _
    $region51: #{tpu_custom_call.1} parent=1 // pred_check_branch
      %442 = sbr.rel (0) target = $region53
    $region52: #{tpu_custom_call.1} parent=1 // pred_region
      %443 = dma.done [#allocation6], 128
    $region53: #{tpu_custom_call.1} parent=1 // pred_fallthru
      _
    %444 = vsyncpa [#allocation5], 1
    %445 = vsyncpa [#allocation8], 1
    %446 = vsyncpa [#allocation11], 1
    %447 = vsyncpa [#allocation6], 1

</llo_original>
